<compile_context>
chip_gen: v6e
topology: v6e:2x2x1
jax: 0.10.0
libtpu: 0.0.40
codegen_flags: <defaults>
</compile_context>

<pallas_src>
import jax
import jax.numpy as jnp
from jax.experimental import pallas as pl
from jax.experimental.pallas import tpu as pltpu

HIDDEN = 32
_MAX_TILE_ROWS = 1024   # packed rows per grid step (= 4096 batch rows)


def _round_up(n, m):
    return ((n + m - 1) // m) * m


def pack_params(params, input_dim, out_dim, hidden=HIDDEN, pack=4):
    """Pack block-diagonal (pack-copy) weights + tiled biases into one
    (rows, pack*hidden) f32 resident block.  Each segment starts on an 8-row
    (sublane-tile) boundary so in-kernel static slices are cheap views."""
    lanes = pack * hidden
    ocols = pack * out_dim

    def f32(a):
        return jnp.asarray(a, jnp.float32)

    def block_diag(w):
        r, c = w.shape
        out = jnp.zeros((pack * r, pack * c), jnp.float32)
        for k in range(pack):
            out = out.at[k * r:(k + 1) * r, k * c:(k + 1) * c].set(w)
        return out

    segs = [("w1", pack * input_dim), ("b1", 1),
            ("w2", pack * hidden), ("b2", 1),
            ("w3", pack * hidden), ("b3", 1),
            ("w4", pack * hidden), ("b4", 1)]
    offs, row = {}, 0
    for name, r in segs:
        offs[name] = row
        row += _round_up(r, 8)

    packed = jnp.zeros((row, lanes), jnp.float32)
    packed = packed.at[offs["w1"]:offs["w1"] + pack * input_dim, :].set(block_diag(f32(params["w1"])))
    packed = packed.at[offs["b1"]:offs["b1"] + 1, :].set(jnp.tile(f32(params["b1"]).reshape(1, hidden), (1, pack)))
    packed = packed.at[offs["w2"]:offs["w2"] + pack * hidden, :].set(block_diag(f32(params["w2"])))
    packed = packed.at[offs["b2"]:offs["b2"] + 1, :].set(jnp.tile(f32(params["b2"]).reshape(1, hidden), (1, pack)))
    packed = packed.at[offs["w3"]:offs["w3"] + pack * hidden, :].set(block_diag(f32(params["w3"])))
    packed = packed.at[offs["b3"]:offs["b3"] + 1, :].set(jnp.tile(f32(params["b3"]).reshape(1, hidden), (1, pack)))
    packed = packed.at[offs["w4"]:offs["w4"] + pack * hidden, 0:ocols].set(block_diag(f32(params["w4"])))
    packed = packed.at[offs["b4"]:offs["b4"] + 1, 0:ocols].set(jnp.tile(f32(params["b4"]).reshape(1, out_dim), (1, pack)))
    return packed, offs


def _build_kernel(input_dim, out_dim, hidden, pack, offs, dot_dtype):
    ocols = pack * out_dim
    n_w1 = pack * input_dim
    n_h = pack * hidden
    rw1, rb1 = offs["w1"], offs["b1"]
    rw2, rb2 = offs["w2"], offs["b2"]
    rw3, rb3 = offs["w3"], offs["b3"]
    rw4, rb4 = offs["w4"], offs["b4"]

    def kernel(x_ref, p_ref, o_ref):
        # X tile: (tile, pack*input_dim); batch sits on lanes, so every
        # activation below is a fully lane-dense (tile, 128) slab.
        x = x_ref[...].astype(dot_dtype)

        # Layer 1: Linear(in, 32) + ReLU   (block-diagonal, pack copies)
        w1 = p_ref[rw1:rw1 + n_w1, :].astype(dot_dtype)
        h = jnp.dot(x, w1, preferred_element_type=jnp.float32)
        h = jnp.maximum(h + p_ref[rb1:rb1 + 1, :], 0.0)      # bias/ReLU in f32

        # Layer 2: Linear(32, 32) + ReLU
        w2 = p_ref[rw2:rw2 + n_h, :].astype(dot_dtype)
        h = jnp.dot(h.astype(dot_dtype), w2, preferred_element_type=jnp.float32)
        h = jnp.maximum(h + p_ref[rb2:rb2 + 1, :], 0.0)

        # Layer 3: Linear(32, 32) + ReLU
        w3 = p_ref[rw3:rw3 + n_h, :].astype(dot_dtype)
        h = jnp.dot(h.astype(dot_dtype), w3, preferred_element_type=jnp.float32)
        h = jnp.maximum(h + p_ref[rb3:rb3 + 1, :], 0.0)

        # Layer 4: Linear(32, out) -- plain dot, no transposed contraction.
        w4 = p_ref[rw4:rw4 + n_h, 0:ocols].astype(dot_dtype)
        out = jnp.dot(h.astype(dot_dtype), w4, preferred_element_type=jnp.float32)
        out = out + p_ref[rb4:rb4 + 1, 0:ocols]
        o_ref[...] = out.astype(o_ref.dtype)

    return kernel


def mlp_forward(x, params, *, batch_tile=None, dot_in_bf16=False):
    """x: (B, input_dim) f32 (or bf16). Returns (B, out_dim) f32.

    dot_in_bf16=True casts only the matmul operands to bf16 (f32 accumulation,
    f32 bias/ReLU) -- recommended on v6e/v7x.
    """
    B, input_dim = x.shape
    hidden = params["w1"].shape[1]
    out_dim = params["w4"].shape[1]
    pack = max(1, 128 // hidden)                 # 4 for hidden=32

    # --- choose grid / tile (in packed rows) ---------------------------------
    bp = pl.cdiv(B, pack)
    if batch_tile is not None:
        tile = _round_up(pl.cdiv(max(int(batch_tile), pack), pack), 8)
    else:
        if bp <= _MAX_TILE_ROWS:
            grid_n = 1                           # single block: no overhead steps
        elif bp <= 2 * _MAX_TILE_ROWS:
            grid_n = 2                           # both TCs on v7x, negligible on 1-TC
        else:
            grid_n = pl.cdiv(bp, _MAX_TILE_ROWS)
        tile = _round_up(pl.cdiv(bp, grid_n), 8)
    grid_n = pl.cdiv(bp, tile)
    bp_pad = grid_n * tile
    b_pad = bp_pad * pack

    # --- free row-major repack of X onto lanes (plus zero-row padding) -------
    xf = x if b_pad == B else jnp.pad(x, ((0, b_pad - B), (0, 0)))
    x_packed = xf.reshape(bp_pad, pack * input_dim)

    packed, offs = pack_params(params, input_dim, out_dim, hidden, pack)
    dot_dtype = jnp.bfloat16 if dot_in_bf16 else jnp.float32
    kernel = _build_kernel(input_dim, out_dim, hidden, pack, offs, dot_dtype)

    ocols = pack * out_dim
    x_bytes = int(x_packed.size) * jnp.dtype(x_packed.dtype).itemsize
    cost = pl.CostEstimate(
        flops=2 * b_pad * (input_dim * hidden + 2 * hidden * hidden + hidden * out_dim),
        transcendentals=0,
        bytes_accessed=x_bytes + b_pad * out_dim * 4 + int(packed.size) * 4,
    )

    out_packed = pl.pallas_call(
        kernel,
        out_shape=jax.ShapeDtypeStruct((bp_pad, ocols), jnp.float32),
        grid=(grid_n,),
        in_specs=[
            # X: one big contiguous tile of packed rows per grid step.
            pl.BlockSpec((tile, pack * input_dim), lambda i: (i, 0)),
            # All parameters: single resident block, constant index -> one fetch.
            pl.BlockSpec(packed.shape, lambda i: (0, 0)),
        ],
        out_specs=pl.BlockSpec((tile, ocols), lambda i: (i, 0)),
        compiler_params=pltpu.CompilerParams(dimension_semantics=("parallel",)),
        cost_estimate=cost,
    )(x_packed, packed)

    out = out_packed.reshape(b_pad, out_dim)     # free row-major un-pack
    if b_pad != B:
        out = out[:B]
    return out


def init_params(key, input_dim, output_dim, hidden=HIDDEN):
    """Deterministic init mimicking PyTorch Linear default U[-1/sqrt(fan_in), +]."""
    dims = [(input_dim, hidden), (hidden, hidden), (hidden, hidden), (hidden, output_dim)]
    params = {}
    keys = jax.random.split(key, 2 * len(dims))
    for idx, (fan_in, fan_out) in enumerate(dims):
        bound = 1.0 / jnp.sqrt(jnp.float32(fan_in))
        params[f"w{idx + 1}"] = jax.random.uniform(
            keys[2 * idx], (fan_in, fan_out), minval=-bound, maxval=bound, dtype=jnp.float32)
        params[f"b{idx + 1}"] = jax.random.uniform(
            keys[2 * idx + 1], (1, fan_out), minval=-bound, maxval=bound, dtype=jnp.float32)
    return params


def mlp_reference(x, params):
    h = x.astype(jnp.float32)
    hi = jax.lax.Precision.HIGHEST
    for i in (1, 2, 3):
        h = jnp.maximum(jnp.dot(h, params[f"w{i}"], precision=hi) + params[f"b{i}"], 0.0)
    return jnp.dot(h, params["w4"], precision=hi) + params["b4"]


if __name__ == "__main__":
    # California-housing shapes: 8 input features, 1 regression target.
    input_dim, output_dim = 8, 1
    batch = 512

    key = jax.random.PRNGKey(0)
    k_params, k_x = jax.random.split(key)
    params = init_params(k_params, input_dim, output_dim)
    x = jax.random.normal(k_x, (batch, input_dim), dtype=jnp.float32)
    ref = mlp_reference(x, params)

    # f32 path (exact module semantics).
    out = jax.block_until_ready(mlp_forward(x, params))
    assert out.shape == (batch, output_dim)
    assert jnp.allclose(out, ref, atol=1e-4, rtol=1e-4)

    # bf16 dot operands (recommended on v6e/v7x), f32 accumulation + f32 bias/ReLU.
    out_bf = jax.block_until_ready(mlp_forward(x, params, dot_in_bf16=True))
    assert jnp.allclose(out_bf, ref, atol=5e-2, rtol=5e-2)

    # Ragged batch exercises the zero-row padding path.
    x_odd = x[:300]
    out_odd = jax.block_until_ready(mlp_forward(x_odd, params))
    assert jnp.allclose(out_odd, mlp_reference(x_odd, params), atol=1e-4, rtol=1e-4)

    # TODO(synk): return_loss branch (MSELoss reduction='none') is trivial
    # elementwise glue outside the kernel and is intentionally not fused here.
    print("KERNEL_OK")
</pallas_src>

<mosaic_0001>
module attributes {stable_mosaic.version = 11 : i64} {
  func.func @kernel(%arg0: i32, %arg1: memref<128x32xf32, #tpu.memory_space<vmem>>, %arg2: memref<448x128xf32, #tpu.memory_space<vmem>>, %arg3: memref<128x4xf32, #tpu.memory_space<vmem>>) attributes {dimension_semantics = [#tpu.dimension_semantics<parallel>], iteration_bounds = array<i64: 1>, scalar_prefetch = 0 : i64, scratch_operands = 0 : i64, tpu.core_type = #tpu.core_type<tc>, window_params = [{transform_indices = @transform_0, window_bounds = array<i64: 128, 32>}, {pipeline_mode = #tpu.pipeline_mode<synchronous>, transform_indices = @transform_1, window_bounds = array<i64: 448, 128>}, {transform_indices = @transform_2, window_bounds = array<i64: 128, 4>}]} {
    %c0 = arith.constant 0 : index
    %c0_0 = arith.constant 0 : index
    %0 = vector.load %arg1[%c0, %c0_0] : memref<128x32xf32, #tpu.memory_space<vmem>>, vector<128x32xf32>
    %c0_1 = arith.constant 0 : index
    %c0_2 = arith.constant 0 : index
    %1 = vector.load %arg2[%c0_1, %c0_2] : memref<448x128xf32, #tpu.memory_space<vmem>>, vector<32x128xf32>
    %cst = arith.constant dense<0.000000e+00> : vector<128x128xf32>
    %2 = tpu.matmul %0, %1, %cst {dimension_numbers = #tpu.dot_dimension_numbers<[1], [0], [0], [1], [0, 0, 1, 1], [], []>} : vector<128x32xf32>, vector<32x128xf32>, vector<128x128xf32> -> vector<128x128xf32>
    %c32 = arith.constant 32 : index
    %c0_3 = arith.constant 0 : index
    %3 = vector.load %arg2[%c32, %c0_3] : memref<448x128xf32, #tpu.memory_space<vmem>>, vector<1x128xf32>
    %4 = vector.broadcast %3 : vector<1x128xf32> to vector<128x128xf32>
    %5 = arith.addf %2, %4 : vector<128x128xf32>
    %cst_4 = arith.constant 0.000000e+00 : f32
    %6 = vector.broadcast %cst_4 : f32 to vector<128x128xf32>
    %7 = arith.maximumf %5, %6 : vector<128x128xf32>
    %c40 = arith.constant 40 : index
    %c0_5 = arith.constant 0 : index
    %8 = vector.load %arg2[%c40, %c0_5] : memref<448x128xf32, #tpu.memory_space<vmem>>, vector<128x128xf32>
    %cst_6 = arith.constant dense<0.000000e+00> : vector<128x128xf32>
    %9 = tpu.matmul %7, %8, %cst_6 {dimension_numbers = #tpu.dot_dimension_numbers<[1], [0], [0], [1], [0, 0, 1, 1], [], []>} : vector<128x128xf32>, vector<128x128xf32>, vector<128x128xf32> -> vector<128x128xf32>
    %c168 = arith.constant 168 : index
    %c0_7 = arith.constant 0 : index
    %10 = vector.load %arg2[%c168, %c0_7] : memref<448x128xf32, #tpu.memory_space<vmem>>, vector<1x128xf32>
    %11 = vector.broadcast %10 : vector<1x128xf32> to vector<128x128xf32>
    %12 = arith.addf %9, %11 : vector<128x128xf32>
    %cst_8 = arith.constant 0.000000e+00 : f32
    %13 = vector.broadcast %cst_8 : f32 to vector<128x128xf32>
    %14 = arith.maximumf %12, %13 : vector<128x128xf32>
    %c176 = arith.constant 176 : index
    %c0_9 = arith.constant 0 : index
    %15 = vector.load %arg2[%c176, %c0_9] : memref<448x128xf32, #tpu.memory_space<vmem>>, vector<128x128xf32>
    %cst_10 = arith.constant dense<0.000000e+00> : vector<128x128xf32>
    %16 = tpu.matmul %14, %15, %cst_10 {dimension_numbers = #tpu.dot_dimension_numbers<[1], [0], [0], [1], [0, 0, 1, 1], [], []>} : vector<128x128xf32>, vector<128x128xf32>, vector<128x128xf32> -> vector<128x128xf32>
    %c304 = arith.constant 304 : index
    %c0_11 = arith.constant 0 : index
    %17 = vector.load %arg2[%c304, %c0_11] : memref<448x128xf32, #tpu.memory_space<vmem>>, vector<1x128xf32>
    %18 = vector.broadcast %17 : vector<1x128xf32> to vector<128x128xf32>
    %19 = arith.addf %16, %18 : vector<128x128xf32>
    %cst_12 = arith.constant 0.000000e+00 : f32
    %20 = vector.broadcast %cst_12 : f32 to vector<128x128xf32>
    %21 = arith.maximumf %19, %20 : vector<128x128xf32>
    %c312 = arith.constant 312 : index
    %c0_13 = arith.constant 0 : index
    %22 = vector.load %arg2[%c312, %c0_13] : memref<448x128xf32, #tpu.memory_space<vmem>>, vector<128x4xf32>
    %cst_14 = arith.constant dense<0.000000e+00> : vector<128x4xf32>
    %23 = tpu.matmul %21, %22, %cst_14 {dimension_numbers = #tpu.dot_dimension_numbers<[1], [0], [0], [1], [0, 0, 1, 1], [], []>} : vector<128x128xf32>, vector<128x4xf32>, vector<128x4xf32> -> vector<128x4xf32>
    %c440 = arith.constant 440 : index
    %c0_15 = arith.constant 0 : index
    %24 = vector.load %arg2[%c440, %c0_15] : memref<448x128xf32, #tpu.memory_space<vmem>>, vector<1x4xf32>
    %25 = vector.broadcast %24 : vector<1x4xf32> to vector<128x4xf32>
    %26 = arith.addf %23, %25 : vector<128x4xf32>
    %c0_16 = arith.constant 0 : index
    %c0_17 = arith.constant 0 : index
    %27 = vector.load %arg3[%c0_16, %c0_17] : memref<128x4xf32, #tpu.memory_space<vmem>>, vector<128x4xf32>
    tpu.vector_store %arg3[%c0_16, %c0_17], %26 {strides = array<i32>} : memref<128x4xf32, #tpu.memory_space<vmem>>, vector<128x4xf32>,
    return
  }
  func.func @transform_0(%arg0: i32) -> (i32, i32) {
    %c0_i32 = arith.constant 0 : i32
    %c0_i32_0 = arith.constant 0 : i32
    return %arg0, %c0_i32 : i32, i32
  }
  func.func @transform_1(%arg0: i32) -> (i32, i32) {
    %c0_i32 = arith.constant 0 : i32
    %c0_i32_0 = arith.constant 0 : i32
    %c0_i32_1 = arith.constant 0 : i32
    return %c0_i32, %c0_i32_0 : i32, i32
  }
  func.func @transform_2(%arg0: i32) -> (i32, i32) {
    %c0_i32 = arith.constant 0 : i32
    %c0_i32_0 = arith.constant 0 : i32
    return %arg0, %c0_i32 : i32, i32
  }
}

</mosaic_0001>

<llo_original>
// kernel: tpu_custom_call.1
$region0: #{tpu_custom_call.1}
  #allocation0 [shape = 'u32[]', space=smem, size = 0x4, offset = 0x4, fixed_abs, tag = 'smem constant byte address 0x4 - core index']
  #allocation1 [shape = 'u32[144,128]{1,0:T(1,128)}', space=vmem, size = 0x12000, scoped, tag = 'internal scratch']
  %s0 = inlined_call_operand.vmem [shape: f32[128,32], index: 0, kind: input, shape index: {}]
  %s1 = inlined_call_operand.hbm [shape: f32[448,128], index: 1, kind: input, shape index: {}]
  %s2 = inlined_call_operand.vmem [shape: f32[128,4], index: 2, kind: output, shape index: {}]
  %s3 = sld [smem:[#allocation0]]
  $region22: #{tpu_custom_call.1} parent=0
    _
  %s5 = ssub.s32 1, %s3
  %s6 = scalar_select 0, %s5, %s3
  $region1: #{tpu_custom_call.1} parent=0
    #allocation2 [shape = 'u8[229376]{0}', space=vmem, size = 0x38000, scoped, tag = 'input window, operand 1, single buffered']
    #allocation3 [shape = 's32[1]{0}', space=sflag, size = 0x4, scoped, tag = 'scoped memory for tpu_custom_call.1']
    %7 = vsyncpa [#allocation3], 0
    // Predicated region
    $region2: #{tpu_custom_call.1} parent=1 // pred_check
      _
    $region3: #{tpu_custom_call.1} parent=1 // pred_check_branch
      %9 = sbr.rel (0) target = $region5
    $region4: #{tpu_custom_call.1} parent=1 // pred_region
      _
    $region5: #{tpu_custom_call.1} parent=1 // pred_fallthru
      _
    // Predicated region
    $region6: #{tpu_custom_call.1} parent=1 // pred_check
      _
    $region7: #{tpu_custom_call.1} parent=1 // pred_check_branch
      %11 = sbr.rel (0) target = $region9
    $region8: #{tpu_custom_call.1} parent=1 // pred_region
      %s13 = ssub.s32 7168, 7168
      %14 = vsyncadd [#allocation3], %s13
      %s15 = sshll.u32 [#allocation2], 4
      %s16 = int_to_ptr.vmem [resolvable:$true] %s15
      %21 = dma.hbm_to_vmem [thread:$0]  %s1, 7168, %s16, [#allocation3], 128, 128, 8
    $region9: #{tpu_custom_call.1} parent=1 // pred_fallthru
      _
    // Predicated region
    $region10: #{tpu_custom_call.1} parent=1 // pred_check
      _
    $region11: #{tpu_custom_call.1} parent=1 // pred_check_branch
      %23 = sbr.rel (0) target = $region13
    $region12: #{tpu_custom_call.1} parent=1 // pred_region
      %24 = dma.done [#allocation3], 7168
    $region13: #{tpu_custom_call.1} parent=1 // pred_fallthru
      _
    %v25 = vld [vmem:[%s0] sm:$0xff]
    %v26 = vld [vmem:[%s0 + $0x8] sm:$0xff]
    %v27 = vld [vmem:[%s0 + $0x10] sm:$0xff]
    %v28 = vld [vmem:[%s0 + $0x18] sm:$0xff]
    %v29 = vld [vmem:[%s0 + $0x20] sm:$0xff]
    %v30 = vld [vmem:[%s0 + $0x28] sm:$0xff]
    %v31 = vld [vmem:[%s0 + $0x30] sm:$0xff]
    %v32 = vld [vmem:[%s0 + $0x38] sm:$0xff]
    %v33 = vld [vmem:[%s0 + $0x40] sm:$0xff]
    %v34 = vld [vmem:[%s0 + $0x48] sm:$0xff]
    %v35 = vld [vmem:[%s0 + $0x50] sm:$0xff]
    %v36 = vld [vmem:[%s0 + $0x58] sm:$0xff]
    %v37 = vld [vmem:[%s0 + $0x60] sm:$0xff]
    %v38 = vld [vmem:[%s0 + $0x68] sm:$0xff]
    %v39 = vld [vmem:[%s0 + $0x70] sm:$0xff]
    %v40 = vld [vmem:[%s0 + $0x78] sm:$0xff]
    %v41 = vld [vmem:[#allocation2] sm:$0xff]
    %v42 = vld [vmem:[#allocation2 + $0x8] sm:$0xff]
    %v43 = vld [vmem:[#allocation2 + $0x10] sm:$0xff]
    %v44 = vld [vmem:[#allocation2 + $0x18] sm:$0xff]
    %v45 = vld [vmem:[#allocation2 + $0x20] sm:$0x1]
    %v46 = vlaneseq
    %v47 = vshrl.u32 %v46, 7
    %v48 = vsub.s32 0, %v47
    %v49 = vrot.slane %v45, %v48
    %vm50 = vcmask 261120
    %v52 = vsel %vm50, %v25, 0
    %v55 = vsel %vm50, %v26, 0
    %v58 = vsel %vm50, %v27, 0
    %v61 = vsel %vm50, %v28, 0
    %v64 = vsel %vm50, %v29, 0
    %v67 = vsel %vm50, %v30, 0
    %v70 = vsel %vm50, %v31, 0
    %v73 = vsel %vm50, %v32, 0
    %v76 = vsel %vm50, %v33, 0
    %v79 = vsel %vm50, %v34, 0
    %v82 = vsel %vm50, %v35, 0
    %v85 = vsel %vm50, %v36, 0
    %v88 = vsel %vm50, %v37, 0
    %v91 = vsel %vm50, %v38, 0
    %v94 = vsel %vm50, %v39, 0
    %v97 = vsel %vm50, %v40, 0
    %99 = vmatprep.subr.mxu0 0.0
    %100 = vmatpush1.msra.mxu0 0.0
    %101 = vmatprep.subr.mxu0 0.0
    %102 = vmatpush1.msra.mxu0 0.0
    %103 = vmatprep.subr.mxu0 0.0
    %104 = vmatpush1.msra.mxu0 0.0
    %105 = vmatprep.subr.mxu0 0.0
    %106 = vmatpush1.msra.mxu0 0.0
    %107 = vmatprep.subr.mxu0 0.0
    %108 = vmatpush1.msra.mxu0 0.0
    %109 = vmatprep.subr.mxu0 0.0
    %110 = vmatpush1.msra.mxu0 0.0
    %111 = vmatprep.subr.mxu0 0.0
    %112 = vmatpush1.msra.mxu0 0.0
    %113 = vmatprep.subr.mxu0 0.0
    %114 = vmatpush1.msra.mxu0 0.0
    %115 = vmatprep.subr.mxu0 0.0
    %116 = vmatpush1.msra.mxu0 0.0
    %117 = vmatprep.subr.mxu0 0.0
    %118 = vmatpush1.msra.mxu0 0.0
    %119 = vmatprep.subr.mxu0 0.0
    %120 = vmatpush1.msra.mxu0 0.0
    %121 = vmatprep.subr.mxu0 0.0
    %122 = vmatpush1.msra.mxu0 0.0
    %123 = vmatprep.subr.mxu0 0.0
    %124 = vmatpush1.msra.mxu0 %v44
    %125 = vmatprep.subr.mxu0 0.0
    %126 = vmatpush1.msra.mxu0 %v43
    %127 = vmatprep.subr.mxu0 0.0
    %128 = vmatpush1.msra.mxu0 %v42
    %129 = vmatprep.subr.mxu0 0.0
    %130 = vmatpush1.msra.mxu0 %v41
    %131 = vmatprep.subr.mxu0 0.0
    %132 = vmatpush2.msra.mxu0 0.0
    %133 = vmatprep.subr.mxu0 0.0
    %134 = vmatpush2.msra.mxu0 0.0
    %135 = vmatprep.subr.mxu0 0.0
    %136 = vmatpush2.msra.mxu0 0.0
    %137 = vmatprep.subr.mxu0 0.0
    %138 = vmatpush2.msra.mxu0 0.0
    %139 = vmatprep.subr.mxu0 0.0
    %140 = vmatpush2.msra.mxu0 0.0
    %141 = vmatprep.subr.mxu0 0.0
    %142 = vmatpush2.msra.mxu0 0.0
    %143 = vmatprep.subr.mxu0 0.0
    %144 = vmatpush2.msra.mxu0 0.0
    %145 = vmatprep.subr.mxu0 0.0
    %146 = vmatpush2.msra.mxu0 0.0
    %147 = vmatprep.subr.mxu0 0.0
    %148 = vmatpush2.msra.mxu0 0.0
    %149 = vmatprep.subr.mxu0 0.0
    %150 = vmatpush2.msra.mxu0 0.0
    %151 = vmatprep.subr.mxu0 0.0
    %152 = vmatpush2.msra.mxu0 0.0
    %153 = vmatprep.subr.mxu0 0.0
    %154 = vmatpush2.msra.mxu0 0.0
    %155 = vmatprep.subr.mxu0 0.0
    %156 = vmatpush2.msra.mxu0 0.0
    %157 = vmatprep.subr.mxu0 0.0
    %158 = vmatpush2.msra.mxu0 0.0
    %159 = vmatprep.subr.mxu0 0.0
    %160 = vmatpush2.msra.mxu0 0.0
    %161 = vmatprep.subr.mxu0 0.0
    %162 = vmatpush2.msra.mxu0 0.0
    %163 = vmatprep.mubr.f32.mxu0 0.0
    %164 = vmatmul.mubr.f32.gmra.mxu0 %v52
    %v165 = vpop.f32.mrf.mxu0
    %v166 = vadd.f32 %v49, %v165
    %v167 = vpop.f32.mrf.mxu0
    %168 = vmatprep.mubr.f32.mxu0 0.0
    %169 = vmatmul.mubr.f32.gmra.mxu0 %v55
    %v170 = vpop.f32.mrf.mxu0
    %v171 = vadd.f32 %v49, %v170
    %v172 = vpop.f32.mrf.mxu0
    %173 = vmatprep.mubr.f32.mxu0 0.0
    %174 = vmatmul.mubr.f32.gmra.mxu0 %v58
    %v175 = vpop.f32.mrf.mxu0
    %v176 = vadd.f32 %v49, %v175
    %v177 = vpop.f32.mrf.mxu0
    %178 = vmatprep.mubr.f32.mxu0 0.0
    %179 = vmatmul.mubr.f32.gmra.mxu0 %v61
    %v180 = vpop.f32.mrf.mxu0
    %v181 = vadd.f32 %v49, %v180
    %v182 = vpop.f32.mrf.mxu0
    %183 = vmatprep.mubr.f32.mxu0 0.0
    %184 = vmatmul.mubr.f32.gmra.mxu0 %v64
    %v185 = vpop.f32.mrf.mxu0
    %v186 = vadd.f32 %v49, %v185
    %v187 = vpop.f32.mrf.mxu0
    %188 = vmatprep.mubr.f32.mxu0 0.0
    %189 = vmatmul.mubr.f32.gmra.mxu0 %v67
    %v190 = vpop.f32.mrf.mxu0
    %v191 = vadd.f32 %v49, %v190
    %v192 = vpop.f32.mrf.mxu0
    %193 = vmatprep.mubr.f32.mxu0 0.0
    %194 = vmatmul.mubr.f32.gmra.mxu0 %v70
    %v195 = vpop.f32.mrf.mxu0
    %v196 = vadd.f32 %v49, %v195
    %v197 = vpop.f32.mrf.mxu0
    %198 = vmatprep.mubr.f32.mxu0 0.0
    %199 = vmatmul.mubr.f32.gmra.mxu0 %v73
    %v200 = vpop.f32.mrf.mxu0
    %v201 = vadd.f32 %v49, %v200
    %v202 = vpop.f32.mrf.mxu0
    %203 = vmatprep.mubr.f32.mxu0 0.0
    %204 = vmatmul.mubr.f32.gmra.mxu0 %v76
    %v205 = vpop.f32.mrf.mxu0
    %v206 = vadd.f32 %v49, %v205
    %v207 = vpop.f32.mrf.mxu0
    %208 = vmatprep.mubr.f32.mxu0 0.0
    %209 = vmatmul.mubr.f32.gmra.mxu0 %v79
    %v210 = vpop.f32.mrf.mxu0
    %v211 = vadd.f32 %v49, %v210
    %v212 = vpop.f32.mrf.mxu0
    %213 = vmatprep.mubr.f32.mxu0 0.0
    %214 = vmatmul.mubr.f32.gmra.mxu0 %v82
    %v215 = vpop.f32.mrf.mxu0
    %v216 = vadd.f32 %v49, %v215
    %v217 = vpop.f32.mrf.mxu0
    %218 = vmatprep.mubr.f32.mxu0 0.0
    %219 = vmatmul.mubr.f32.gmra.mxu0 %v85
    %v220 = vpop.f32.mrf.mxu0
    %v221 = vadd.f32 %v49, %v220
    %v222 = vpop.f32.mrf.mxu0
    %223 = vmatprep.mubr.f32.mxu0 0.0
    %224 = vmatmul.mubr.f32.gmra.mxu0 %v88
    %v225 = vpop.f32.mrf.mxu0
    %v226 = vadd.f32 %v49, %v225
    %v227 = vpop.f32.mrf.mxu0
    %228 = vmatprep.mubr.f32.mxu0 0.0
    %229 = vmatmul.mubr.f32.gmra.mxu0 %v91
    %v230 = vpop.f32.mrf.mxu0
    %v231 = vadd.f32 %v49, %v230
    %v232 = vpop.f32.mrf.mxu0
    %233 = vmatprep.mubr.f32.mxu0 0.0
    %234 = vmatmul.mubr.f32.gmra.mxu0 %v94
    %v235 = vpop.f32.mrf.mxu0
    %v236 = vadd.f32 %v49, %v235
    %v237 = vpop.f32.mrf.mxu0
    %238 = vmatprep.mubr.f32.mxu0 0.0
    %239 = vmatmul.mubr.f32.gmra.mxu0 %v97
    %v240 = vpop.f32.mrf.mxu0
    %v241 = vadd.f32 %v49, %v240
    %v242 = vpop.f32.mrf.mxu0
    %243 = vdwg.mxu0
    %v244 = vmax.f32 %v166, 0.0
    %v245 = vmax.f32 %v171, 0.0
    %v246 = vmax.f32 %v176, 0.0
    %v247 = vmax.f32 %v181, 0.0
    %v248 = vmax.f32 %v186, 0.0
    %v249 = vmax.f32 %v191, 0.0
    %v250 = vmax.f32 %v196, 0.0
    %v251 = vmax.f32 %v201, 0.0
    %v252 = vmax.f32 %v206, 0.0
    %v253 = vmax.f32 %v211, 0.0
    %v254 = vmax.f32 %v216, 0.0
    %v255 = vmax.f32 %v221, 0.0
    %v256 = vmax.f32 %v226, 0.0
    %v257 = vmax.f32 %v231, 0.0
    %v258 = vmax.f32 %v236, 0.0
    %v259 = vmax.f32 %v241, 0.0
    %v260 = vld [vmem:[#allocation2 + $0x28] sm:$0xff]
    %v261 = vld [vmem:[#allocation2 + $0x30] sm:$0xff]
    %v262 = vld [vmem:[#allocation2 + $0x38] sm:$0xff]
    %v263 = vld [vmem:[#allocation2 + $0x40] sm:$0xff]
    %v264 = vld [vmem:[#allocation2 + $0x48] sm:$0xff]
    %v265 = vld [vmem:[#allocation2 + $0x50] sm:$0xff]
    %v266 = vld [vmem:[#allocation2 + $0x58] sm:$0xff]
    %v267 = vld [vmem:[#allocation2 + $0x60] sm:$0xff]
    %v268 = vld [vmem:[#allocation2 + $0x68] sm:$0xff]
    %v269 = vld [vmem:[#allocation2 + $0x70] sm:$0xff]
    %v270 = vld [vmem:[#allocation2 + $0x78] sm:$0xff]
    %v271 = vld [vmem:[#allocation2 + $0x80] sm:$0xff]
    %v272 = vld [vmem:[#allocation2 + $0x88] sm:$0xff]
    %v273 = vld [vmem:[#allocation2 + $0x90] sm:$0xff]
    %v274 = vld [vmem:[#allocation2 + $0x98] sm:$0xff]
    %v275 = vld [vmem:[#allocation2 + $0xa0] sm:$0xff]
    %v276 = vld [vmem:[#allocation2 + $0xa8] sm:$0x1]
    %v277 = vlaneseq
    %v278 = vshrl.u32 %v277, 7
    %v279 = vsub.s32 0, %v278
    %v280 = vrot.slane %v276, %v279
    %281 = vmatprep.subr.mxu0 0.0
    %282 = vmatpush1.msra.mxu0 %v275
    %283 = vmatprep.subr.mxu0 0.0
    %284 = vmatpush1.msra.mxu0 %v274
    %285 = vmatprep.subr.mxu0 0.0
    %286 = vmatpush1.msra.mxu0 %v273
    %287 = vmatprep.subr.mxu0 0.0
    %288 = vmatpush1.msra.mxu0 %v272
    %289 = vmatprep.subr.mxu0 0.0
    %290 = vmatpush1.msra.mxu0 %v271
    %291 = vmatprep.subr.mxu0 0.0
    %292 = vmatpush1.msra.mxu0 %v270
    %293 = vmatprep.subr.mxu0 0.0
    %294 = vmatpush1.msra.mxu0 %v269
    %295 = vmatprep.subr.mxu0 0.0
    %296 = vmatpush1.msra.mxu0 %v268
    %297 = vmatprep.subr.mxu0 0.0
    %298 = vmatpush1.msra.mxu0 %v267
    %299 = vmatprep.subr.mxu0 0.0
    %300 = vmatpush1.msra.mxu0 %v266
    %301 = vmatprep.subr.mxu0 0.0
    %302 = vmatpush1.msra.mxu0 %v265
    %303 = vmatprep.subr.mxu0 0.0
    %304 = vmatpush1.msra.mxu0 %v264
    %305 = vmatprep.subr.mxu0 0.0
    %306 = vmatpush1.msra.mxu0 %v263
    %307 = vmatprep.subr.mxu0 0.0
    %308 = vmatpush1.msra.mxu0 %v262
    %309 = vmatprep.subr.mxu0 0.0
    %310 = vmatpush1.msra.mxu0 %v261
    %311 = vmatprep.subr.mxu0 0.0
    %312 = vmatpush1.msra.mxu0 %v260
    %313 = vmatprep.subr.mxu0 0.0
    %314 = vmatpush2.msra.mxu0 0.0
    %315 = vmatprep.subr.mxu0 0.0
    %316 = vmatpush2.msra.mxu0 0.0
    %317 = vmatprep.subr.mxu0 0.0
    %318 = vmatpush2.msra.mxu0 0.0
    %319 = vmatprep.subr.mxu0 0.0
    %320 = vmatpush2.msra.mxu0 0.0
    %321 = vmatprep.subr.mxu0 0.0
    %322 = vmatpush2.msra.mxu0 0.0
    %323 = vmatprep.subr.mxu0 0.0
    %324 = vmatpush2.msra.mxu0 0.0
    %325 = vmatprep.subr.mxu0 0.0
    %326 = vmatpush2.msra.mxu0 0.0
    %327 = vmatprep.subr.mxu0 0.0
    %328 = vmatpush2.msra.mxu0 0.0
    %329 = vmatprep.subr.mxu0 0.0
    %330 = vmatpush2.msra.mxu0 0.0
    %331 = vmatprep.subr.mxu0 0.0
    %332 = vmatpush2.msra.mxu0 0.0
    %333 = vmatprep.subr.mxu0 0.0
    %334 = vmatpush2.msra.mxu0 0.0
    %335 = vmatprep.subr.mxu0 0.0
    %336 = vmatpush2.msra.mxu0 0.0
    %337 = vmatprep.subr.mxu0 0.0
    %338 = vmatpush2.msra.mxu0 0.0
    %339 = vmatprep.subr.mxu0 0.0
    %340 = vmatpush2.msra.mxu0 0.0
    %341 = vmatprep.subr.mxu0 0.0
    %342 = vmatpush2.msra.mxu0 0.0
    %343 = vmatprep.subr.mxu0 0.0
    %344 = vmatpush2.msra.mxu0 0.0
    %345 = vmatprep.mubr.f32.mxu0 0.0
    %346 = vmatmul.mubr.f32.gmra.mxu0 %v244
    %v347 = vpop.f32.mrf.mxu0
    %v348 = vadd.f32 %v280, %v347
    %v349 = vpop.f32.mrf.mxu0
    %350 = vmatprep.mubr.f32.mxu0 0.0
    %351 = vmatmul.mubr.f32.gmra.mxu0 %v245
    %v352 = vpop.f32.mrf.mxu0
    %v353 = vadd.f32 %v280, %v352
    %v354 = vpop.f32.mrf.mxu0
    %355 = vmatprep.mubr.f32.mxu0 0.0
    %356 = vmatmul.mubr.f32.gmra.mxu0 %v246
    %v357 = vpop.f32.mrf.mxu0
    %v358 = vadd.f32 %v280, %v357
    %v359 = vpop.f32.mrf.mxu0
    %360 = vmatprep.mubr.f32.mxu0 0.0
    %361 = vmatmul.mubr.f32.gmra.mxu0 %v247
    %v362 = vpop.f32.mrf.mxu0
    %v363 = vadd.f32 %v280, %v362
    %v364 = vpop.f32.mrf.mxu0
    %365 = vmatprep.mubr.f32.mxu0 0.0
    %366 = vmatmul.mubr.f32.gmra.mxu0 %v248
    %v367 = vpop.f32.mrf.mxu0
    %v368 = vadd.f32 %v280, %v367
    %v369 = vpop.f32.mrf.mxu0
    %370 = vmatprep.mubr.f32.mxu0 0.0
    %371 = vmatmul.mubr.f32.gmra.mxu0 %v249
    %v372 = vpop.f32.mrf.mxu0
    %v373 = vadd.f32 %v280, %v372
    %v374 = vpop.f32.mrf.mxu0
    %375 = vmatprep.mubr.f32.mxu0 0.0
    %376 = vmatmul.mubr.f32.gmra.mxu0 %v250
    %v377 = vpop.f32.mrf.mxu0
    %v378 = vadd.f32 %v280, %v377
    %v379 = vpop.f32.mrf.mxu0
    %380 = vmatprep.mubr.f32.mxu0 0.0
    %381 = vmatmul.mubr.f32.gmra.mxu0 %v251
    %v382 = vpop.f32.mrf.mxu0
    %v383 = vadd.f32 %v280, %v382
    %v384 = vpop.f32.mrf.mxu0
    %385 = vmatprep.mubr.f32.mxu0 0.0
    %386 = vmatmul.mubr.f32.gmra.mxu0 %v252
    %v387 = vpop.f32.mrf.mxu0
    %v388 = vadd.f32 %v280, %v387
    %v389 = vpop.f32.mrf.mxu0
    %390 = vmatprep.mubr.f32.mxu0 0.0
    %391 = vmatmul.mubr.f32.gmra.mxu0 %v253
    %v392 = vpop.f32.mrf.mxu0
    %v393 = vadd.f32 %v280, %v392
    %v394 = vpop.f32.mrf.mxu0
    %395 = vmatprep.mubr.f32.mxu0 0.0
    %396 = vmatmul.mubr.f32.gmra.mxu0 %v254
    %v397 = vpop.f32.mrf.mxu0
    %v398 = vadd.f32 %v280, %v397
    %v399 = vpop.f32.mrf.mxu0
    %400 = vmatprep.mubr.f32.mxu0 0.0
    %401 = vmatmul.mubr.f32.gmra.mxu0 %v255
    %v402 = vpop.f32.mrf.mxu0
    %v403 = vadd.f32 %v280, %v402
    %v404 = vpop.f32.mrf.mxu0
    %405 = vmatprep.mubr.f32.mxu0 0.0
    %406 = vmatmul.mubr.f32.gmra.mxu0 %v256
    %v407 = vpop.f32.mrf.mxu0
    %v408 = vadd.f32 %v280, %v407
    %v409 = vpop.f32.mrf.mxu0
    %410 = vmatprep.mubr.f32.mxu0 0.0
    %411 = vmatmul.mubr.f32.gmra.mxu0 %v257
    %v412 = vpop.f32.mrf.mxu0
    %v413 = vadd.f32 %v280, %v412
    %v414 = vpop.f32.mrf.mxu0
    %415 = vmatprep.mubr.f32.mxu0 0.0
    %416 = vmatmul.mubr.f32.gmra.mxu0 %v258
    %v417 = vpop.f32.mrf.mxu0
    %v418 = vadd.f32 %v280, %v417
    %v419 = vpop.f32.mrf.mxu0
    %420 = vmatprep.mubr.f32.mxu0 0.0
    %421 = vmatmul.mubr.f32.gmra.mxu0 %v259
    %v422 = vpop.f32.mrf.mxu0
    %v423 = vadd.f32 %v280, %v422
    %v424 = vpop.f32.mrf.mxu0
    %425 = vdwg.mxu0
    %v426 = vmax.f32 %v348, 0.0
    %v427 = vmax.f32 %v353, 0.0
    %v428 = vmax.f32 %v358, 0.0
    %v429 = vmax.f32 %v363, 0.0
    %v430 = vmax.f32 %v368, 0.0
    %v431 = vmax.f32 %v373, 0.0
    %v432 = vmax.f32 %v378, 0.0
    %v433 = vmax.f32 %v383, 0.0
    %v434 = vmax.f32 %v388, 0.0
    %v435 = vmax.f32 %v393, 0.0
    %v436 = vmax.f32 %v398, 0.0
    %v437 = vmax.f32 %v403, 0.0
    %v438 = vmax.f32 %v408, 0.0
    %v439 = vmax.f32 %v413, 0.0
    %v440 = vmax.f32 %v418, 0.0
    %v441 = vmax.f32 %v423, 0.0
    %v442 = vld [vmem:[#allocation2 + $0xb0] sm:$0xff]
    %v443 = vld [vmem:[#allocation2 + $0xb8] sm:$0xff]
    %v444 = vld [vmem:[#allocation2 + $0xc0] sm:$0xff]
    %v445 = vld [vmem:[#allocation2 + $0xc8] sm:$0xff]
    %v446 = vld [vmem:[#allocation2 + $0xd0] sm:$0xff]
    %v447 = vld [vmem:[#allocation2 + $0xd8] sm:$0xff]
    %v448 = vld [vmem:[#allocation2 + $0xe0] sm:$0xff]
    %v449 = vld [vmem:[#allocation2 + $0xe8] sm:$0xff]
    %v450 = vld [vmem:[#allocation2 + $0xf0] sm:$0xff]
    %v451 = vld [vmem:[#allocation2 + $0xf8] sm:$0xff]
    %v452 = vld [vmem:[#allocation2 + $0x100] sm:$0xff]
    %v453 = vld [vmem:[#allocation2 + $0x108] sm:$0xff]
    %v454 = vld [vmem:[#allocation2 + $0x110] sm:$0xff]
    %v455 = vld [vmem:[#allocation2 + $0x118] sm:$0xff]
    %v456 = vld [vmem:[#allocation2 + $0x120] sm:$0xff]
    %v457 = vld [vmem:[#allocation2 + $0x128] sm:$0xff]
    %v458 = vld [vmem:[#allocation2 + $0x130] sm:$0x1]
    %v459 = vlaneseq
    %v460 = vshrl.u32 %v459, 7
    %v461 = vsub.s32 0, %v460
    %v462 = vrot.slane %v458, %v461
    %463 = vmatprep.subr.mxu0 0.0
    %464 = vmatpush1.msra.mxu0 %v457
    %465 = vmatprep.subr.mxu0 0.0
    %466 = vmatpush1.msra.mxu0 %v456
    %467 = vmatprep.subr.mxu0 0.0
    %468 = vmatpush1.msra.mxu0 %v455
    %469 = vmatprep.subr.mxu0 0.0
    %470 = vmatpush1.msra.mxu0 %v454
    %471 = vmatprep.subr.mxu0 0.0
    %472 = vmatpush1.msra.mxu0 %v453
    %473 = vmatprep.subr.mxu0 0.0
    %474 = vmatpush1.msra.mxu0 %v452
    %475 = vmatprep.subr.mxu0 0.0
    %476 = vmatpush1.msra.mxu0 %v451
    %477 = vmatprep.subr.mxu0 0.0
    %478 = vmatpush1.msra.mxu0 %v450
    %479 = vmatprep.subr.mxu0 0.0
    %480 = vmatpush1.msra.mxu0 %v449
    %481 = vmatprep.subr.mxu0 0.0
    %482 = vmatpush1.msra.mxu0 %v448
    %483 = vmatprep.subr.mxu0 0.0
    %484 = vmatpush1.msra.mxu0 %v447
    %485 = vmatprep.subr.mxu0 0.0
    %486 = vmatpush1.msra.mxu0 %v446
    %487 = vmatprep.subr.mxu0 0.0
    %488 = vmatpush1.msra.mxu0 %v445
    %489 = vmatprep.subr.mxu0 0.0
    %490 = vmatpush1.msra.mxu0 %v444
    %491 = vmatprep.subr.mxu0 0.0
    %492 = vmatpush1.msra.mxu0 %v443
    %493 = vmatprep.subr.mxu0 0.0
    %494 = vmatpush1.msra.mxu0 %v442
    %495 = vmatprep.subr.mxu0 0.0
    %496 = vmatpush2.msra.mxu0 0.0
    %497 = vmatprep.subr.mxu0 0.0
    %498 = vmatpush2.msra.mxu0 0.0
    %499 = vmatprep.subr.mxu0 0.0
    %500 = vmatpush2.msra.mxu0 0.0
    %501 = vmatprep.subr.mxu0 0.0
    %502 = vmatpush2.msra.mxu0 0.0
    %503 = vmatprep.subr.mxu0 0.0
    %504 = vmatpush2.msra.mxu0 0.0
    %505 = vmatprep.subr.mxu0 0.0
    %506 = vmatpush2.msra.mxu0 0.0
    %507 = vmatprep.subr.mxu0 0.0
    %508 = vmatpush2.msra.mxu0 0.0
    %509 = vmatprep.subr.mxu0 0.0
    %510 = vmatpush2.msra.mxu0 0.0
    %511 = vmatprep.subr.mxu0 0.0
    %512 = vmatpush2.msra.mxu0 0.0
    %513 = vmatprep.subr.mxu0 0.0
    %514 = vmatpush2.msra.mxu0 0.0
    %515 = vmatprep.subr.mxu0 0.0
    %516 = vmatpush2.msra.mxu0 0.0
    %517 = vmatprep.subr.mxu0 0.0
    %518 = vmatpush2.msra.mxu0 0.0
    %519 = vmatprep.subr.mxu0 0.0
    %520 = vmatpush2.msra.mxu0 0.0
    %521 = vmatprep.subr.mxu0 0.0
    %522 = vmatpush2.msra.mxu0 0.0
    %523 = vmatprep.subr.mxu0 0.0
    %524 = vmatpush2.msra.mxu0 0.0
    %525 = vmatprep.subr.mxu0 0.0
    %526 = vmatpush2.msra.mxu0 0.0
    %527 = vmatprep.mubr.f32.mxu0 0.0
    %528 = vmatmul.mubr.f32.gmra.mxu0 %v426
    %v529 = vpop.f32.mrf.mxu0
    %v530 = vadd.f32 %v462, %v529
    %v531 = vpop.f32.mrf.mxu0
    %532 = vmatprep.mubr.f32.mxu0 0.0
    %533 = vmatmul.mubr.f32.gmra.mxu0 %v427
    %v534 = vpop.f32.mrf.mxu0
    %v535 = vadd.f32 %v462, %v534
    %v536 = vpop.f32.mrf.mxu0
    %537 = vmatprep.mubr.f32.mxu0 0.0
    %538 = vmatmul.mubr.f32.gmra.mxu0 %v428
    %v539 = vpop.f32.mrf.mxu0
    %v540 = vadd.f32 %v462, %v539
    %v541 = vpop.f32.mrf.mxu0
    %542 = vmatprep.mubr.f32.mxu0 0.0
    %543 = vmatmul.mubr.f32.gmra.mxu0 %v429
    %v544 = vpop.f32.mrf.mxu0
    %v545 = vadd.f32 %v462, %v544
    %v546 = vpop.f32.mrf.mxu0
    %547 = vmatprep.mubr.f32.mxu0 0.0
    %548 = vmatmul.mubr.f32.gmra.mxu0 %v430
    %v549 = vpop.f32.mrf.mxu0
    %v550 = vadd.f32 %v462, %v549
    %v551 = vpop.f32.mrf.mxu0
    %552 = vmatprep.mubr.f32.mxu0 0.0
    %553 = vmatmul.mubr.f32.gmra.mxu0 %v431
    %v554 = vpop.f32.mrf.mxu0
    %v555 = vadd.f32 %v462, %v554
    %v556 = vpop.f32.mrf.mxu0
    %557 = vmatprep.mubr.f32.mxu0 0.0
    %558 = vmatmul.mubr.f32.gmra.mxu0 %v432
    %v559 = vpop.f32.mrf.mxu0
    %v560 = vadd.f32 %v462, %v559
    %v561 = vpop.f32.mrf.mxu0
    %562 = vmatprep.mubr.f32.mxu0 0.0
    %563 = vmatmul.mubr.f32.gmra.mxu0 %v433
    %v564 = vpop.f32.mrf.mxu0
    %v565 = vadd.f32 %v462, %v564
    %v566 = vpop.f32.mrf.mxu0
    %567 = vmatprep.mubr.f32.mxu0 0.0
    %568 = vmatmul.mubr.f32.gmra.mxu0 %v434
    %v569 = vpop.f32.mrf.mxu0
    %v570 = vadd.f32 %v462, %v569
    %v571 = vpop.f32.mrf.mxu0
    %572 = vmatprep.mubr.f32.mxu0 0.0
    %573 = vmatmul.mubr.f32.gmra.mxu0 %v435
    %v574 = vpop.f32.mrf.mxu0
    %v575 = vadd.f32 %v462, %v574
    %v576 = vpop.f32.mrf.mxu0
    %577 = vmatprep.mubr.f32.mxu0 0.0
    %578 = vmatmul.mubr.f32.gmra.mxu0 %v436
    %v579 = vpop.f32.mrf.mxu0
    %v580 = vadd.f32 %v462, %v579
    %v581 = vpop.f32.mrf.mxu0
    %582 = vmatprep.mubr.f32.mxu0 0.0
    %583 = vmatmul.mubr.f32.gmra.mxu0 %v437
    %v584 = vpop.f32.mrf.mxu0
    %v585 = vadd.f32 %v462, %v584
    %v586 = vpop.f32.mrf.mxu0
    %587 = vmatprep.mubr.f32.mxu0 0.0
    %588 = vmatmul.mubr.f32.gmra.mxu0 %v438
    %v589 = vpop.f32.mrf.mxu0
    %v590 = vadd.f32 %v462, %v589
    %v591 = vpop.f32.mrf.mxu0
    %592 = vmatprep.mubr.f32.mxu0 0.0
    %593 = vmatmul.mubr.f32.gmra.mxu0 %v439
    %v594 = vpop.f32.mrf.mxu0
    %v595 = vadd.f32 %v462, %v594
    %v596 = vpop.f32.mrf.mxu0
    %597 = vmatprep.mubr.f32.mxu0 0.0
    %598 = vmatmul.mubr.f32.gmra.mxu0 %v440
    %v599 = vpop.f32.mrf.mxu0
    %v600 = vadd.f32 %v462, %v599
    %v601 = vpop.f32.mrf.mxu0
    %602 = vmatprep.mubr.f32.mxu0 0.0
    %603 = vmatmul.mubr.f32.gmra.mxu0 %v441
    %v604 = vpop.f32.mrf.mxu0
    %v605 = vadd.f32 %v462, %v604
    %v606 = vpop.f32.mrf.mxu0
    %607 = vdwg.mxu0
    %v608 = vmax.f32 %v530, 0.0
    %v609 = vmax.f32 %v535, 0.0
    %v610 = vmax.f32 %v540, 0.0
    %v611 = vmax.f32 %v545, 0.0
    %v612 = vmax.f32 %v550, 0.0
    %v613 = vmax.f32 %v555, 0.0
    %v614 = vmax.f32 %v560, 0.0
    %v615 = vmax.f32 %v565, 0.0
    %v616 = vmax.f32 %v570, 0.0
    %v617 = vmax.f32 %v575, 0.0
    %v618 = vmax.f32 %v580, 0.0
    %v619 = vmax.f32 %v585, 0.0
    %v620 = vmax.f32 %v590, 0.0
    %v621 = vmax.f32 %v595, 0.0
    %v622 = vmax.f32 %v600, 0.0
    %v623 = vmax.f32 %v605, 0.0
    %v624 = vld [vmem:[#allocation2 + $0x138] sm:$0xff]
    %v625 = vld [vmem:[#allocation2 + $0x140] sm:$0xff]
    %v626 = vld [vmem:[#allocation2 + $0x148] sm:$0xff]
    %v627 = vld [vmem:[#allocation2 + $0x150] sm:$0xff]
    %v628 = vld [vmem:[#allocation2 + $0x158] sm:$0xff]
    %v629 = vld [vmem:[#allocation2 + $0x160] sm:$0xff]
    %v630 = vld [vmem:[#allocation2 + $0x168] sm:$0xff]
    %v631 = vld [vmem:[#allocation2 + $0x170] sm:$0xff]
    %v632 = vld [vmem:[#allocation2 + $0x178] sm:$0xff]
    %v633 = vld [vmem:[#allocation2 + $0x180] sm:$0xff]
    %v634 = vld [vmem:[#allocation2 + $0x188] sm:$0xff]
    %v635 = vld [vmem:[#allocation2 + $0x190] sm:$0xff]
    %v636 = vld [vmem:[#allocation2 + $0x198] sm:$0xff]
    %v637 = vld [vmem:[#allocation2 + $0x1a0] sm:$0xff]
    %v638 = vld [vmem:[#allocation2 + $0x1a8] sm:$0xff]
    %v639 = vld [vmem:[#allocation2 + $0x1b0] sm:$0xff]
    %v640 = vld [vmem:[#allocation2 + $0x1b8] sm:$0x1]
    %v641 = vlaneseq
    %v642 = vshrl.u32 %v641, 7
    %v643 = vsub.s32 0, %v642
    %v644 = vrot.slane %v640, %v643
    %645 = vmatprep.subr.mxu0 0.0
    %646 = vmatpush1.msra.mxu0 %v639
    %647 = vmatprep.subr.mxu0 0.0
    %648 = vmatpush1.msra.mxu0 %v638
    %649 = vmatprep.subr.mxu0 0.0
    %650 = vmatpush1.msra.mxu0 %v637
    %651 = vmatprep.subr.mxu0 0.0
    %652 = vmatpush1.msra.mxu0 %v636
    %653 = vmatprep.subr.mxu0 0.0
    %654 = vmatpush1.msra.mxu0 %v635
    %655 = vmatprep.subr.mxu0 0.0
    %656 = vmatpush1.msra.mxu0 %v634
    %657 = vmatprep.subr.mxu0 0.0
    %658 = vmatpush1.msra.mxu0 %v633
    %659 = vmatprep.subr.mxu0 0.0
    %660 = vmatpush1.msra.mxu0 %v632
    %661 = vmatprep.subr.mxu0 0.0
    %662 = vmatpush1.msra.mxu0 %v631
    %663 = vmatprep.subr.mxu0 0.0
    %664 = vmatpush1.msra.mxu0 %v630
    %665 = vmatprep.subr.mxu0 0.0
    %666 = vmatpush1.msra.mxu0 %v629
    %667 = vmatprep.subr.mxu0 0.0
    %668 = vmatpush1.msra.mxu0 %v628
    %669 = vmatprep.subr.mxu0 0.0
    %670 = vmatpush1.msra.mxu0 %v627
    %671 = vmatprep.subr.mxu0 0.0
    %672 = vmatpush1.msra.mxu0 %v626
    %673 = vmatprep.subr.mxu0 0.0
    %674 = vmatpush1.msra.mxu0 %v625
    %675 = vmatprep.subr.mxu0 0.0
    %676 = vmatpush1.msra.mxu0 %v624
    %677 = vmatprep.subr.mxu0 0.0
    %678 = vmatpush2.msra.mxu0 0.0
    %679 = vmatprep.subr.mxu0 0.0
    %680 = vmatpush2.msra.mxu0 0.0
    %681 = vmatprep.subr.mxu0 0.0
    %682 = vmatpush2.msra.mxu0 0.0
    %683 = vmatprep.subr.mxu0 0.0
    %684 = vmatpush2.msra.mxu0 0.0
    %685 = vmatprep.subr.mxu0 0.0
    %686 = vmatpush2.msra.mxu0 0.0
    %687 = vmatprep.subr.mxu0 0.0
    %688 = vmatpush2.msra.mxu0 0.0
    %689 = vmatprep.subr.mxu0 0.0
    %690 = vmatpush2.msra.mxu0 0.0
    %691 = vmatprep.subr.mxu0 0.0
    %692 = vmatpush2.msra.mxu0 0.0
    %693 = vmatprep.subr.mxu0 0.0
    %694 = vmatpush2.msra.mxu0 0.0
    %695 = vmatprep.subr.mxu0 0.0
    %696 = vmatpush2.msra.mxu0 0.0
    %697 = vmatprep.subr.mxu0 0.0
    %698 = vmatpush2.msra.mxu0 0.0
    %699 = vmatprep.subr.mxu0 0.0
    %700 = vmatpush2.msra.mxu0 0.0
    %701 = vmatprep.subr.mxu0 0.0
    %702 = vmatpush2.msra.mxu0 0.0
    %703 = vmatprep.subr.mxu0 0.0
    %704 = vmatpush2.msra.mxu0 0.0
    %705 = vmatprep.subr.mxu0 0.0
    %706 = vmatpush2.msra.mxu0 0.0
    %707 = vmatprep.subr.mxu0 0.0
    %708 = vmatpush2.msra.mxu0 0.0
    %709 = vmatprep.mubr.f32.mxu0 0.0
    %710 = vmatmul.mubr.f32.gmra.mxu0 %v608
    %v711 = vpop.f32.mrf.mxu0
    %v712 = vadd.f32 %v644, %v711
    %v713 = vpop.f32.mrf.mxu0
    %714 = vmatprep.mubr.f32.mxu0 0.0
    %715 = vmatmul.mubr.f32.gmra.mxu0 %v609
    %v716 = vpop.f32.mrf.mxu0
    %v717 = vadd.f32 %v644, %v716
    %v718 = vpop.f32.mrf.mxu0
    %719 = vmatprep.mubr.f32.mxu0 0.0
    %720 = vmatmul.mubr.f32.gmra.mxu0 %v610
    %v721 = vpop.f32.mrf.mxu0
    %v722 = vadd.f32 %v644, %v721
    %v723 = vpop.f32.mrf.mxu0
    %724 = vmatprep.mubr.f32.mxu0 0.0
    %725 = vmatmul.mubr.f32.gmra.mxu0 %v611
    %v726 = vpop.f32.mrf.mxu0
    %v727 = vadd.f32 %v644, %v726
    %v728 = vpop.f32.mrf.mxu0
    %729 = vmatprep.mubr.f32.mxu0 0.0
    %730 = vmatmul.mubr.f32.gmra.mxu0 %v612
    %v731 = vpop.f32.mrf.mxu0
    %v732 = vadd.f32 %v644, %v731
    %v733 = vpop.f32.mrf.mxu0
    %734 = vmatprep.mubr.f32.mxu0 0.0
    %735 = vmatmul.mubr.f32.gmra.mxu0 %v613
    %v736 = vpop.f32.mrf.mxu0
    %v737 = vadd.f32 %v644, %v736
    %v738 = vpop.f32.mrf.mxu0
    %739 = vmatprep.mubr.f32.mxu0 0.0
    %740 = vmatmul.mubr.f32.gmra.mxu0 %v614
    %v741 = vpop.f32.mrf.mxu0
    %v742 = vadd.f32 %v644, %v741
    %v743 = vpop.f32.mrf.mxu0
    %744 = vmatprep.mubr.f32.mxu0 0.0
    %745 = vmatmul.mubr.f32.gmra.mxu0 %v615
    %v746 = vpop.f32.mrf.mxu0
    %v747 = vadd.f32 %v644, %v746
    %v748 = vpop.f32.mrf.mxu0
    %749 = vmatprep.mubr.f32.mxu0 0.0
    %750 = vmatmul.mubr.f32.gmra.mxu0 %v616
    %v751 = vpop.f32.mrf.mxu0
    %v752 = vadd.f32 %v644, %v751
    %v753 = vpop.f32.mrf.mxu0
    %754 = vmatprep.mubr.f32.mxu0 0.0
    %755 = vmatmul.mubr.f32.gmra.mxu0 %v617
    %v756 = vpop.f32.mrf.mxu0
    %v757 = vadd.f32 %v644, %v756
    %v758 = vpop.f32.mrf.mxu0
    %759 = vmatprep.mubr.f32.mxu0 0.0
    %760 = vmatmul.mubr.f32.gmra.mxu0 %v618
    %v761 = vpop.f32.mrf.mxu0
    %v762 = vadd.f32 %v644, %v761
    %v763 = vpop.f32.mrf.mxu0
    %764 = vmatprep.mubr.f32.mxu0 0.0
    %765 = vmatmul.mubr.f32.gmra.mxu0 %v619
    %v766 = vpop.f32.mrf.mxu0
    %v767 = vadd.f32 %v644, %v766
    %v768 = vpop.f32.mrf.mxu0
    %769 = vmatprep.mubr.f32.mxu0 0.0
    %770 = vmatmul.mubr.f32.gmra.mxu0 %v620
    %v771 = vpop.f32.mrf.mxu0
    %v772 = vadd.f32 %v644, %v771
    %v773 = vpop.f32.mrf.mxu0
    %774 = vmatprep.mubr.f32.mxu0 0.0
    %775 = vmatmul.mubr.f32.gmra.mxu0 %v621
    %v776 = vpop.f32.mrf.mxu0
    %v777 = vadd.f32 %v644, %v776
    %v778 = vpop.f32.mrf.mxu0
    %779 = vmatprep.mubr.f32.mxu0 0.0
    %780 = vmatmul.mubr.f32.gmra.mxu0 %v622
    %v781 = vpop.f32.mrf.mxu0
    %v782 = vadd.f32 %v644, %v781
    %v783 = vpop.f32.mrf.mxu0
    %784 = vmatprep.mubr.f32.mxu0 0.0
    %785 = vmatmul.mubr.f32.gmra.mxu0 %v623
    %v786 = vpop.f32.mrf.mxu0
    %v787 = vadd.f32 %v644, %v786
    %v788 = vpop.f32.mrf.mxu0
    %789 = vdwg.mxu0
    %vm790 = vcmask 31744
    %791 = vst.msk [vmem:[%s2] sm:$0xff] %vm790, %v712
    %792 = vst.msk [vmem:[%s2 + $0x8] sm:$0xff] %vm790, %v717
    %793 = vst.msk [vmem:[%s2 + $0x10] sm:$0xff] %vm790, %v722
    %794 = vst.msk [vmem:[%s2 + $0x18] sm:$0xff] %vm790, %v727
    %795 = vst.msk [vmem:[%s2 + $0x20] sm:$0xff] %vm790, %v732
    %796 = vst.msk [vmem:[%s2 + $0x28] sm:$0xff] %vm790, %v737
    %797 = vst.msk [vmem:[%s2 + $0x30] sm:$0xff] %vm790, %v742
    %798 = vst.msk [vmem:[%s2 + $0x38] sm:$0xff] %vm790, %v747
    %799 = vst.msk [vmem:[%s2 + $0x40] sm:$0xff] %vm790, %v752
    %800 = vst.msk [vmem:[%s2 + $0x48] sm:$0xff] %vm790, %v757
    %801 = vst.msk [vmem:[%s2 + $0x50] sm:$0xff] %vm790, %v762
    %802 = vst.msk [vmem:[%s2 + $0x58] sm:$0xff] %vm790, %v767
    %803 = vst.msk [vmem:[%s2 + $0x60] sm:$0xff] %vm790, %v772
    %804 = vst.msk [vmem:[%s2 + $0x68] sm:$0xff] %vm790, %v777
    %805 = vst.msk [vmem:[%s2 + $0x70] sm:$0xff] %vm790, %v782
    %806 = vst.msk [vmem:[%s2 + $0x78] sm:$0xff] %vm790, %v787
    // Predicated region
    $region14: #{tpu_custom_call.1} parent=1 // pred_check
      _
    $region15: #{tpu_custom_call.1} parent=1 // pred_check_branch
      %808 = sbr.rel (0) target = $region17
    $region16: #{tpu_custom_call.1} parent=1 // pred_region
      _
    $region17: #{tpu_custom_call.1} parent=1 // pred_fallthru
      _
    // Predicated region
    $region18: #{tpu_custom_call.1} parent=1 // pred_check
      _
    $region19: #{tpu_custom_call.1} parent=1 // pred_check_branch
      %810 = sbr.rel (0) target = $region21
    $region20: #{tpu_custom_call.1} parent=1 // pred_region
      _
    $region21: #{tpu_custom_call.1} parent=1 // pred_fallthru
      _
    %811 = vsyncpa [#allocation3], 1

</llo_original>
